<compile_context>
chip_gen: v5e
topology: v5e:2x2
jax: 0.10.0
libtpu: 0.0.40
codegen_flags: <defaults>
</compile_context>

<pallas_src>
import functools

import jax
import jax.numpy as jnp
from jax.experimental import pallas as pl
from jax.experimental.pallas import tpu as pltpu


def _upsample_conv_kernel(xpf_ref, w_ref, b_ref, o_ref, *, H, W):
    """One batch element.

    xpf_ref: (1, Cin, H*W + 2*W + 2)  flattened input, zero-padded by W+1 on lanes
    w_ref:   (2, 2, Cout, 4*Cin)      per-phase pre-summed, K-concatenated weights
    b_ref:   (Cout, 1)                bias
    o_ref:   (1, 2, 2, Cout, H*W)     phase-decomposed output:
             o[0, a, b, c, h*W + w] == out_full[c, 2*h + a, 2*w + b]
    """
    HW = H * W

    # Column-boundary masks (row boundaries are already zero thanks to the W+1
    # lane padding of the flattened input).  Built once, shared by all taps.
    col = jax.lax.broadcasted_iota(jnp.int32, (1, HW), 1) % W
    not_first_col = col > 0
    not_last_col = col < W - 1

    def tap(dr, dc):
        # result[c, h*W + w] == x[c, h + dr, w + dc]  (0 outside the image)
        start = (W + 1) + dr * W + dc           # static lane offset
        v = xpf_ref[0, :, start:start + HW]     # (Cin, HW) contiguous lane load
        if dc == -1:
            v = jnp.where(not_first_col, v, 0.0)
        elif dc == 1:
            v = jnp.where(not_last_col, v, 0.0)
        return v

    # The 9 distinct shifted inputs; each output phase consumes 4 of them.
    shifted = [[tap(dr, dc) for dc in (-1, 0, 1)] for dr in (-1, 0, 1)]

    bias = b_ref[...]                           # (Cout, 1), hoisted out of the loops

    for a in range(2):
        for b in range(2):
            # Concatenate this phase's 4 taps along K -> one MXU matmul per phase.
            xcat = jnp.concatenate(
                [shifted[a + p][b + q] for p in range(2) for q in range(2)],
                axis=0)                                                # (4*Cin, HW)
            acc = jnp.dot(w_ref[a, b], xcat,
                          preferred_element_type=jnp.float32)          # (Cout, HW)
            o_ref[0, a, b] = (acc + bias).astype(o_ref.dtype)


def upsample_with_conv(x_nchw, w_hwio, bias):
    """Equivalent of Upsample(in_channels, with_conv=True).forward (NCHW)."""
    N, C, H, W = x_nchw.shape
    cout = w_hwio.shape[-1]
    HW = H * W

    # Channels-first, flattened spatial (a free reshape of NCHW), zero-padded by
    # W+1 on the flat axis so every +/-1 row/col shift is a contiguous lane slice.
    xpf = jnp.pad(x_nchw.reshape(N, C, HW), ((0, 0), (0, 0), (W + 1, W + 1)))

    # Pre-sum the 3x3 kernel into per-phase 2x2 taps: the nearest-2x upsample maps
    # two of the three kernel rows (cols) of each output phase onto the same source
    # row (col).  S[a, p, dh] == 1 iff kernel row dh lands on source-row tap p for
    # output row-phase a; same matrix for columns.
    S = jnp.array([[[1.0, 0.0, 0.0], [0.0, 1.0, 1.0]],
                   [[1.0, 1.0, 0.0], [0.0, 0.0, 1.0]]], dtype=w_hwio.dtype)
    # wcat[a, b, o, (p*2+q)*Cin + i] = sum_{dh,dw} S[a,p,dh] * S[b,q,dw] * W[dh,dw,i,o]
    wcat = jnp.einsum('apd,bqe,deio->abopqi', S, S, w_hwio,
                      precision=jax.lax.Precision.HIGHEST)
    wcat = wcat.reshape(2, 2, cout, 4 * C)
    bias2d = bias.reshape(cout, 1)

    itemsize = jnp.dtype(x_nchw.dtype).itemsize
    cost = pl.CostEstimate(
        flops=2 * N * 4 * cout * (4 * C) * HW,
        transcendentals=0,
        bytes_accessed=(xpf.size + wcat.size + bias2d.size
                        + N * 4 * cout * HW) * itemsize,
    )

    out_phases = pl.pallas_call(
        functools.partial(_upsample_conv_kernel, H=H, W=W),
        out_shape=jax.ShapeDtypeStruct((N, 2, 2, cout, HW), x_nchw.dtype),
        grid_spec=pltpu.PrefetchScalarGridSpec(
            num_scalar_prefetch=0,
            grid=(N,),
            in_specs=[
                pl.BlockSpec((1, C, HW + 2 * W + 2), lambda n: (n, 0, 0)),
                pl.BlockSpec((2, 2, cout, 4 * C), lambda n: (0, 0, 0, 0)),
                pl.BlockSpec((cout, 1), lambda n: (0, 0)),
            ],
            out_specs=pl.BlockSpec((1, 2, 2, cout, HW),
                                   lambda n: (n, 0, 0, 0, 0)),
        ),
        compiler_params=pltpu.CompilerParams(
            dimension_semantics=("parallel",),
            vmem_limit_bytes=32 * 1024 * 1024,
        ),
        cost_estimate=cost,
    )(xpf, wcat, bias2d)

    # Interleave the 4 parity phases back into the 2x-upsampled image:
    # (N, 2, 2, Cout, H, W) -> (N, Cout, H, 2, W, 2) -> (N, Cout, 2H, 2W).
    out = out_phases.reshape(N, 2, 2, cout, H, W)
    return jnp.transpose(out, (0, 3, 4, 1, 5, 2)).reshape(N, cout, 2 * H, 2 * W)


def _reference(x_nchw, w_hwio, bias):
    """Pure-JAX reference: nearest 2x upsample + 3x3 conv (padding=1)."""
    x_nhwc = jnp.transpose(x_nchw, (0, 2, 3, 1))
    up = jnp.repeat(jnp.repeat(x_nhwc, 2, axis=1), 2, axis=2)
    out = jax.lax.conv_general_dilated(
        up, w_hwio, window_strides=(1, 1), padding=((1, 1), (1, 1)),
        dimension_numbers=("NHWC", "HWIO", "NHWC"),
        precision=jax.lax.Precision.HIGHEST)
    out = out + bias[None, None, None, :]
    return jnp.transpose(out, (0, 3, 1, 2))


if __name__ == "__main__":
    key = jax.random.PRNGKey(0)
    kx, kw, kb = jax.random.split(key, 3)

    # Small shapes consistent with the module: batch=2, in_channels=4, spatial=16.
    N, C, H, W = 2, 4, 16, 16
    x = jax.random.normal(kx, (N, C, H, W), jnp.float32)
    # Deterministic synthetic Conv2d(C, C, 3, padding=1) parameters (HWIO layout).
    w = jax.random.normal(kw, (3, 3, C, C), jnp.float32) * 0.1
    b = jax.random.normal(kb, (C,), jnp.float32) * 0.1

    out = jax.jit(upsample_with_conv)(x, w, b)
    out = jax.block_until_ready(out)
    assert out.shape == (N, C, 2 * H, 2 * W), out.shape

    ref = _reference(x, w, b)
    err = float(jnp.max(jnp.abs(out - ref)))
    assert jnp.allclose(out, ref, atol=2e-3, rtol=2e-3), err

    print("KERNEL_OK")
</pallas_src>

<mosaic_0001>
module attributes {stable_mosaic.version = 11 : i64} {
  func.func @_upsample_conv_kernel(%arg0: i32, %arg1: memref<1x4x290xf32, #tpu.memory_space<vmem>>, %arg2: memref<2x2x4x16xf32, #tpu.memory_space<vmem>>, %arg3: memref<4x1xf32, #tpu.memory_space<vmem>>, %arg4: memref<1x2x2x4x256xf32, #tpu.memory_space<vmem>>) attributes {dimension_semantics = [#tpu.dimension_semantics<parallel>], iteration_bounds = array<i64: 2>, scalar_prefetch = 0 : i64, scratch_operands = 0 : i64, tpu.core_type = #tpu.core_type<tc>, window_params = [{transform_indices = @transform_0, window_bounds = array<i64: 1, 4, 290>}, {pipeline_mode = #tpu.pipeline_mode<synchronous>, transform_indices = @transform_1, window_bounds = array<i64: 2, 2, 4, 16>}, {pipeline_mode = #tpu.pipeline_mode<synchronous>, transform_indices = @transform_2, window_bounds = array<i64: 4, 1>}, {transform_indices = @transform_3, window_bounds = array<i64: 1, 2, 2, 4, 256>}]} {
    %0 = tpu.iota {dimensions = array<i32: 1>} : vector<1x256xi32>
    %c16_i32 = arith.constant 16 : i32
    %c0_i32 = arith.constant 0 : i32
    %1 = arith.cmpi eq, %c16_i32, %c0_i32 : i32
    %c1_i32 = arith.constant 1 : i32
    %2 = arith.select %1, %c1_i32, %c16_i32 : i32
    %3 = vector.broadcast %2 : i32 to vector<1x256xi32>
    %4 = arith.remsi %0, %3 : vector<1x256xi32>
    %c0_i32_0 = arith.constant 0 : i32
    %5 = vector.broadcast %c0_i32_0 : i32 to vector<1x256xi32>
    %6 = arith.cmpi ne, %4, %5 : vector<1x256xi32>
    %c0_i32_1 = arith.constant 0 : i32
    %7 = vector.broadcast %c0_i32_1 : i32 to vector<1x256xi32>
    %8 = arith.cmpi slt, %4, %7 : vector<1x256xi32>
    %c0_i32_2 = arith.constant 0 : i32
    %9 = arith.cmpi slt, %2, %c0_i32_2 : i32
    %10 = vector.broadcast %9 : i1 to vector<1x256xi1>
    %11 = vector.broadcast %10 : vector<1x256xi1> to vector<1x256xi1>
    %12 = arith.xori %8, %11 : vector<1x256xi1>
    %13 = arith.andi %12, %6 : vector<1x256xi1>
    %14 = vector.broadcast %2 : i32 to vector<1x256xi32>
    %15 = arith.addi %4, %14 : vector<1x256xi32>
    %16 = arith.select %13, %15, %4 : vector<1x256xi1>, vector<1x256xi32>
    %c0_i32_3 = arith.constant 0 : i32
    %17 = vector.broadcast %c0_i32_3 : i32 to vector<1x256xi32>
    %18 = arith.cmpi sgt, %16, %17 : vector<1x256xi32>
    %c15_i32 = arith.constant 15 : i32
    %19 = vector.broadcast %c15_i32 : i32 to vector<1x256xi32>
    %20 = arith.cmpi slt, %16, %19 : vector<1x256xi32>
    %c0 = arith.constant 0 : index
    %c0_4 = arith.constant 0 : index
    %c0_5 = arith.constant 0 : index
    %21 = vector.load %arg1[%c0, %c0_4, %c0_5] : memref<1x4x290xf32, #tpu.memory_space<vmem>>, vector<1x4x256xf32>
    %22 = vector.shape_cast %21 : vector<1x4x256xf32> to vector<4x256xf32>
    %cst = arith.constant 0.000000e+00 : f32
    %23 = vector.shape_cast %18 : vector<1x256xi1> to vector<1x256xi1>
    %24 = vector.broadcast %23 : vector<1x256xi1> to vector<4x256xi1>
    %25 = vector.broadcast %cst : f32 to vector<4x256xf32>
    %26 = arith.select %24, %22, %25 : vector<4x256xi1>, vector<4x256xf32>
    %c0_6 = arith.constant 0 : index
    %c0_7 = arith.constant 0 : index
    %c1 = arith.constant 1 : index
    %27 = vector.load %arg1[%c0_6, %c0_7, %c1] : memref<1x4x290xf32, #tpu.memory_space<vmem>>, vector<1x4x256xf32>
    %28 = vector.shape_cast %27 : vector<1x4x256xf32> to vector<4x256xf32>
    %c0_8 = arith.constant 0 : index
    %c0_9 = arith.constant 0 : index
    %c2 = arith.constant 2 : index
    %29 = vector.load %arg1[%c0_8, %c0_9, %c2] : memref<1x4x290xf32, #tpu.memory_space<vmem>>, vector<1x4x256xf32>
    %30 = vector.shape_cast %29 : vector<1x4x256xf32> to vector<4x256xf32>
    %cst_10 = arith.constant 0.000000e+00 : f32
    %31 = vector.shape_cast %20 : vector<1x256xi1> to vector<1x256xi1>
    %32 = vector.broadcast %31 : vector<1x256xi1> to vector<4x256xi1>
    %33 = vector.broadcast %cst_10 : f32 to vector<4x256xf32>
    %34 = arith.select %32, %30, %33 : vector<4x256xi1>, vector<4x256xf32>
    %c0_11 = arith.constant 0 : index
    %c0_12 = arith.constant 0 : index
    %c16 = arith.constant 16 : index
    %35 = vector.load %arg1[%c0_11, %c0_12, %c16] : memref<1x4x290xf32, #tpu.memory_space<vmem>>, vector<1x4x256xf32>
    %36 = vector.shape_cast %35 : vector<1x4x256xf32> to vector<4x256xf32>
    %cst_13 = arith.constant 0.000000e+00 : f32
    %37 = vector.shape_cast %18 : vector<1x256xi1> to vector<1x256xi1>
    %38 = vector.broadcast %37 : vector<1x256xi1> to vector<4x256xi1>
    %39 = vector.broadcast %cst_13 : f32 to vector<4x256xf32>
    %40 = arith.select %38, %36, %39 : vector<4x256xi1>, vector<4x256xf32>
    %c0_14 = arith.constant 0 : index
    %c0_15 = arith.constant 0 : index
    %c17 = arith.constant 17 : index
    %41 = vector.load %arg1[%c0_14, %c0_15, %c17] : memref<1x4x290xf32, #tpu.memory_space<vmem>>, vector<1x4x256xf32>
    %42 = vector.shape_cast %41 : vector<1x4x256xf32> to vector<4x256xf32>
    %c0_16 = arith.constant 0 : index
    %c0_17 = arith.constant 0 : index
    %c18 = arith.constant 18 : index
    %43 = vector.load %arg1[%c0_16, %c0_17, %c18] : memref<1x4x290xf32, #tpu.memory_space<vmem>>, vector<1x4x256xf32>
    %44 = vector.shape_cast %43 : vector<1x4x256xf32> to vector<4x256xf32>
    %cst_18 = arith.constant 0.000000e+00 : f32
    %45 = vector.shape_cast %20 : vector<1x256xi1> to vector<1x256xi1>
    %46 = vector.broadcast %45 : vector<1x256xi1> to vector<4x256xi1>
    %47 = vector.broadcast %cst_18 : f32 to vector<4x256xf32>
    %48 = arith.select %46, %44, %47 : vector<4x256xi1>, vector<4x256xf32>
    %c0_19 = arith.constant 0 : index
    %c0_20 = arith.constant 0 : index
    %c32 = arith.constant 32 : index
    %49 = vector.load %arg1[%c0_19, %c0_20, %c32] : memref<1x4x290xf32, #tpu.memory_space<vmem>>, vector<1x4x256xf32>
    %50 = vector.shape_cast %49 : vector<1x4x256xf32> to vector<4x256xf32>
    %cst_21 = arith.constant 0.000000e+00 : f32
    %51 = vector.shape_cast %18 : vector<1x256xi1> to vector<1x256xi1>
    %52 = vector.broadcast %51 : vector<1x256xi1> to vector<4x256xi1>
    %53 = vector.broadcast %cst_21 : f32 to vector<4x256xf32>
    %54 = arith.select %52, %50, %53 : vector<4x256xi1>, vector<4x256xf32>
    %c0_22 = arith.constant 0 : index
    %c0_23 = arith.constant 0 : index
    %c33 = arith.constant 33 : index
    %55 = vector.load %arg1[%c0_22, %c0_23, %c33] : memref<1x4x290xf32, #tpu.memory_space<vmem>>, vector<1x4x256xf32>
    %56 = vector.shape_cast %55 : vector<1x4x256xf32> to vector<4x256xf32>
    %c0_24 = arith.constant 0 : index
    %c0_25 = arith.constant 0 : index
    %c34 = arith.constant 34 : index
    %57 = vector.load %arg1[%c0_24, %c0_25, %c34] : memref<1x4x290xf32, #tpu.memory_space<vmem>>, vector<1x4x256xf32>
    %58 = vector.shape_cast %57 : vector<1x4x256xf32> to vector<4x256xf32>
    %cst_26 = arith.constant 0.000000e+00 : f32
    %59 = vector.shape_cast %20 : vector<1x256xi1> to vector<1x256xi1>
    %60 = vector.broadcast %59 : vector<1x256xi1> to vector<4x256xi1>
    %61 = vector.broadcast %cst_26 : f32 to vector<4x256xf32>
    %62 = arith.select %60, %58, %61 : vector<4x256xi1>, vector<4x256xf32>
    %c0_27 = arith.constant 0 : index
    %c0_28 = arith.constant 0 : index
    %63 = vector.load %arg3[%c0_27, %c0_28] : memref<4x1xf32, #tpu.memory_space<vmem>>, vector<4x1xf32>
    %64 = tpu.concatenate %26, %28, %40, %42 in 0 : vector<4x256xf32>, vector<4x256xf32>, vector<4x256xf32>, vector<4x256xf32> -> vector<16x256xf32>
    %c0_29 = arith.constant 0 : index
    %c0_30 = arith.constant 0 : index
    %c0_31 = arith.constant 0 : index
    %c0_32 = arith.constant 0 : index
    %65 = vector.load %arg2[%c0_29, %c0_30, %c0_31, %c0_32] : memref<2x2x4x16xf32, #tpu.memory_space<vmem>>, vector<1x1x4x16xf32>
    %66 = vector.shape_cast %65 : vector<1x1x4x16xf32> to vector<4x16xf32>
    %cst_33 = arith.constant dense<0.000000e+00> : vector<4x256xf32>
    %67 = tpu.matmul %66, %64, %cst_33 {dimension_numbers = #tpu.dot_dimension_numbers<[1], [0], [0], [1], [0, 0, 1, 1], [], []>} : vector<4x16xf32>, vector<16x256xf32>, vector<4x256xf32> -> vector<4x256xf32>
    %68 = vector.broadcast %63 : vector<4x1xf32> to vector<4x256xf32>
    %69 = arith.addf %67, %68 : vector<4x256xf32>
    %c0_34 = arith.constant 0 : index
    %c0_35 = arith.constant 0 : index
    %c0_36 = arith.constant 0 : index
    %c0_37 = arith.constant 0 : index
    %c0_38 = arith.constant 0 : index
    %70 = vector.load %arg4[%c0_34, %c0_35, %c0_36, %c0_37, %c0_38] : memref<1x2x2x4x256xf32, #tpu.memory_space<vmem>>, vector<1x1x1x4x256xf32>
    %71 = vector.shape_cast %70 : vector<1x1x1x4x256xf32> to vector<4x256xf32>
    %72 = vector.shape_cast %69 : vector<4x256xf32> to vector<1x1x1x4x256xf32>
    tpu.vector_store %arg4[%c0_34, %c0_35, %c0_36, %c0_37, %c0_38], %72 {strides = array<i32>} : memref<1x2x2x4x256xf32, #tpu.memory_space<vmem>>, vector<1x1x1x4x256xf32>,
    %73 = tpu.concatenate %28, %34, %42, %48 in 0 : vector<4x256xf32>, vector<4x256xf32>, vector<4x256xf32>, vector<4x256xf32> -> vector<16x256xf32>
    %c0_39 = arith.constant 0 : index
    %c1_40 = arith.constant 1 : index
    %c0_41 = arith.constant 0 : index
    %c0_42 = arith.constant 0 : index
    %74 = vector.load %arg2[%c0_39, %c1_40, %c0_41, %c0_42] : memref<2x2x4x16xf32, #tpu.memory_space<vmem>>, vector<1x1x4x16xf32>
    %75 = vector.shape_cast %74 : vector<1x1x4x16xf32> to vector<4x16xf32>
    %cst_43 = arith.constant dense<0.000000e+00> : vector<4x256xf32>
    %76 = tpu.matmul %75, %73, %cst_43 {dimension_numbers = #tpu.dot_dimension_numbers<[1], [0], [0], [1], [0, 0, 1, 1], [], []>} : vector<4x16xf32>, vector<16x256xf32>, vector<4x256xf32> -> vector<4x256xf32>
    %77 = vector.broadcast %63 : vector<4x1xf32> to vector<4x256xf32>
    %78 = arith.addf %76, %77 : vector<4x256xf32>
    %c0_44 = arith.constant 0 : index
    %c0_45 = arith.constant 0 : index
    %c1_46 = arith.constant 1 : index
    %c0_47 = arith.constant 0 : index
    %c0_48 = arith.constant 0 : index
    %79 = vector.load %arg4[%c0_44, %c0_45, %c1_46, %c0_47, %c0_48] : memref<1x2x2x4x256xf32, #tpu.memory_space<vmem>>, vector<1x1x1x4x256xf32>
    %80 = vector.shape_cast %79 : vector<1x1x1x4x256xf32> to vector<4x256xf32>
    %81 = vector.shape_cast %78 : vector<4x256xf32> to vector<1x1x1x4x256xf32>
    tpu.vector_store %arg4[%c0_44, %c0_45, %c1_46, %c0_47, %c0_48], %81 {strides = array<i32>} : memref<1x2x2x4x256xf32, #tpu.memory_space<vmem>>, vector<1x1x1x4x256xf32>,
    %82 = tpu.concatenate %40, %42, %54, %56 in 0 : vector<4x256xf32>, vector<4x256xf32>, vector<4x256xf32>, vector<4x256xf32> -> vector<16x256xf32>
    %c1_49 = arith.constant 1 : index
    %c0_50 = arith.constant 0 : index
    %c0_51 = arith.constant 0 : index
    %c0_52 = arith.constant 0 : index
    %83 = vector.load %arg2[%c1_49, %c0_50, %c0_51, %c0_52] : memref<2x2x4x16xf32, #tpu.memory_space<vmem>>, vector<1x1x4x16xf32>
    %84 = vector.shape_cast %83 : vector<1x1x4x16xf32> to vector<4x16xf32>
    %cst_53 = arith.constant dense<0.000000e+00> : vector<4x256xf32>
    %85 = tpu.matmul %84, %82, %cst_53 {dimension_numbers = #tpu.dot_dimension_numbers<[1], [0], [0], [1], [0, 0, 1, 1], [], []>} : vector<4x16xf32>, vector<16x256xf32>, vector<4x256xf32> -> vector<4x256xf32>
    %86 = vector.broadcast %63 : vector<4x1xf32> to vector<4x256xf32>
    %87 = arith.addf %85, %86 : vector<4x256xf32>
    %c0_54 = arith.constant 0 : index
    %c1_55 = arith.constant 1 : index
    %c0_56 = arith.constant 0 : index
    %c0_57 = arith.constant 0 : index
    %c0_58 = arith.constant 0 : index
    %88 = vector.load %arg4[%c0_54, %c1_55, %c0_56, %c0_57, %c0_58] : memref<1x2x2x4x256xf32, #tpu.memory_space<vmem>>, vector<1x1x1x4x256xf32>
    %89 = vector.shape_cast %88 : vector<1x1x1x4x256xf32> to vector<4x256xf32>
    %90 = vector.shape_cast %87 : vector<4x256xf32> to vector<1x1x1x4x256xf32>
    tpu.vector_store %arg4[%c0_54, %c1_55, %c0_56, %c0_57, %c0_58], %90 {strides = array<i32>} : memref<1x2x2x4x256xf32, #tpu.memory_space<vmem>>, vector<1x1x1x4x256xf32>,
    %91 = tpu.concatenate %42, %48, %56, %62 in 0 : vector<4x256xf32>, vector<4x256xf32>, vector<4x256xf32>, vector<4x256xf32> -> vector<16x256xf32>
    %c1_59 = arith.constant 1 : index
    %c1_60 = arith.constant 1 : index
    %c0_61 = arith.constant 0 : index
    %c0_62 = arith.constant 0 : index
    %92 = vector.load %arg2[%c1_59, %c1_60, %c0_61, %c0_62] : memref<2x2x4x16xf32, #tpu.memory_space<vmem>>, vector<1x1x4x16xf32>
    %93 = vector.shape_cast %92 : vector<1x1x4x16xf32> to vector<4x16xf32>
    %cst_63 = arith.constant dense<0.000000e+00> : vector<4x256xf32>
    %94 = tpu.matmul %93, %91, %cst_63 {dimension_numbers = #tpu.dot_dimension_numbers<[1], [0], [0], [1], [0, 0, 1, 1], [], []>} : vector<4x16xf32>, vector<16x256xf32>, vector<4x256xf32> -> vector<4x256xf32>
    %95 = vector.broadcast %63 : vector<4x1xf32> to vector<4x256xf32>
    %96 = arith.addf %94, %95 : vector<4x256xf32>
    %c0_64 = arith.constant 0 : index
    %c1_65 = arith.constant 1 : index
    %c1_66 = arith.constant 1 : index
    %c0_67 = arith.constant 0 : index
    %c0_68 = arith.constant 0 : index
    %97 = vector.load %arg4[%c0_64, %c1_65, %c1_66, %c0_67, %c0_68] : memref<1x2x2x4x256xf32, #tpu.memory_space<vmem>>, vector<1x1x1x4x256xf32>
    %98 = vector.shape_cast %97 : vector<1x1x1x4x256xf32> to vector<4x256xf32>
    %99 = vector.shape_cast %96 : vector<4x256xf32> to vector<1x1x1x4x256xf32>
    tpu.vector_store %arg4[%c0_64, %c1_65, %c1_66, %c0_67, %c0_68], %99 {strides = array<i32>} : memref<1x2x2x4x256xf32, #tpu.memory_space<vmem>>, vector<1x1x1x4x256xf32>,
    return
  }
  func.func @transform_0(%arg0: i32) -> (i32, i32, i32) {
    %c0_i32 = arith.constant 0 : i32
    %c0_i32_0 = arith.constant 0 : i32
    %c0_i32_1 = arith.constant 0 : i32
    return %arg0, %c0_i32, %c0_i32_0 : i32, i32, i32
  }
  func.func @transform_1(%arg0: i32) -> (i32, i32, i32, i32) {
    %c0_i32 = arith.constant 0 : i32
    %c0_i32_0 = arith.constant 0 : i32
    %c0_i32_1 = arith.constant 0 : i32
    %c0_i32_2 = arith.constant 0 : i32
    %c0_i32_3 = arith.constant 0 : i32
    return %c0_i32, %c0_i32_0, %c0_i32_1, %c0_i32_2 : i32, i32, i32, i32
  }
  func.func @transform_2(%arg0: i32) -> (i32, i32) {
    %c0_i32 = arith.constant 0 : i32
    %c0_i32_0 = arith.constant 0 : i32
    %c0_i32_1 = arith.constant 0 : i32
    return %c0_i32, %c0_i32_0 : i32, i32
  }
  func.func @transform_3(%arg0: i32) -> (i32, i32, i32, i32, i32) {
    %c0_i32 = arith.constant 0 : i32
    %c0_i32_0 = arith.constant 0 : i32
    %c0_i32_1 = arith.constant 0 : i32
    %c0_i32_2 = arith.constant 0 : i32
    %c0_i32_3 = arith.constant 0 : i32
    return %arg0, %c0_i32, %c0_i32_0, %c0_i32_1, %c0_i32_2 : i32, i32, i32, i32, i32
  }
}

</mosaic_0001>

<llo_original>
// kernel: upsample_with_conv.1
$region0: #{upsample_with_conv.1}
  #allocation0 [shape = 'u32[]', space=smem, size = 0x4, offset = 0x4, fixed_abs, tag = 'smem constant byte address 0x4 - core index']
  #allocation1 [shape = 'u32[72,128]{1,0:T(1,128)}', space=vmem, size = 0x9000, scoped, tag = 'internal scratch']
  %s0 = inlined_call_operand.vmem [shape: f32[2,4,290], index: 0, kind: input, shape index: {}]
  %s1 = inlined_call_operand.vmem [shape: f32[2,2,4,16], index: 1, kind: input, shape index: {}]
  %s2 = inlined_call_operand.vmem [shape: f32[4,1], index: 2, kind: input, shape index: {}]
  %s3 = inlined_call_operand.vmem [shape: f32[2,2,2,4,256], index: 3, kind: output, shape index: {}]
  %s4 = sld [smem:[#allocation0]]
  $region45: #{upsample_with_conv.1} parent=0
    _
  %s6 = ssub.s32 1, %s4
  %s7 = scalar_select 0, %s6, %s4
  loop: start=0, step=1, limit=4
  $region2: #{upsample_with_conv.1} parent=0 // loop_pre_header
    _
  $region3: #{upsample_with_conv.1} parent=0 // loop_header
    %s9 = sphi 0, %s13
    %p10 = scmp.ge.s32.totalorder %s9, 4
    %s19 = sphi 0, %s21
    %s22 = sphi 0, %s19
    %s23 = sphi 0, %s22
    %s39 = sphi 0, %s23
    %s43 = sphi 0, %s43
    %s45 = sphi 0, %s43
    %s46 = sphi 0, %s45
    %s60 = sphi 0, %s46
    %s64 = sphi 0, %s64
    %s66 = sphi 0, %s64
    %s67 = sphi 0, %s66
    %s81 = sphi 0, %s67
    %s87 = sphi 0, %s89
    %s90 = sphi 0, %s87
    %s91 = sphi 0, %s90
    %s107 = sphi 0, %s91
  $region4: #{upsample_with_conv.1} parent=0 // loop_header_branch
    %12 = sbr.rel (%p10) target = $region8
  $region5: #{upsample_with_conv.1} parent=0 // loop_body
    %s14 = ssub.s32 %s9, 1
    %s15 = ssub.s32 %s9, 2
    %s16 = sadd.s32 %s9, 1
    %s17 = ssub.s32 %s9, %s16
    %p18 = scmp.eq.s32.totalorder %s17, 0
    %s20 = sadd.s32 %s19, 1
    %s21 = scalar_select %p18, %s19, %s20
    %p24 = pneg %p18
    %p25 = scmp.eq.s32.totalorder %s9, 1
    %p26 = por %p24, %p25
    %p27 = scmp.ne.s32.totalorder %s19, %s22
    %p28 = scmp.eq.s32.totalorder %s9, 0
    %p29 = por %p27, %p28
    %p30 = scmp.ne.s32.totalorder %s19, %s22
    %p31 = scmp.eq.s32.totalorder %s14, 1
    %p32 = por %p30, %p31
    %p33 = scmp.ne.s32.totalorder %s22, %s23
    %p34 = scmp.eq.s32.totalorder %s14, 0
    %p35 = por %p33, %p34
    %p36 = scmp.ne.s32.totalorder %s22, %s23
    %p37 = scmp.eq.s32.totalorder %s15, 1
    %p38 = por %p36, %p37
    %p40 = scmp.ne.s32.totalorder %s23, %s39
    %p41 = scmp.eq.s32.totalorder %s15, 0
    %p42 = por %p40, %p41
    %s44 = sadd.s32 %s43, 1
    %p47 = scmp.eq.s32.totalorder %s9, 1
    %p48 = scmp.ne.s32.totalorder %s43, %s45
    %p49 = scmp.eq.s32.totalorder %s9, 0
    %p50 = por %p48, %p49
    %p51 = scmp.ne.s32.totalorder %s43, %s45
    %p52 = scmp.eq.s32.totalorder %s14, 1
    %p53 = por %p51, %p52
    %p54 = scmp.ne.s32.totalorder %s45, %s46
    %p55 = scmp.eq.s32.totalorder %s14, 0
    %p56 = por %p54, %p55
    %p57 = scmp.ne.s32.totalorder %s45, %s46
    %p58 = scmp.eq.s32.totalorder %s15, 1
    %p59 = por %p57, %p58
    %p61 = scmp.ne.s32.totalorder %s46, %s60
    %p62 = scmp.eq.s32.totalorder %s15, 0
    %p63 = por %p61, %p62
    %s65 = sadd.s32 %s64, 1
    %p68 = scmp.eq.s32.totalorder %s9, 1
    %p69 = scmp.ne.s32.totalorder %s64, %s66
    %p70 = scmp.eq.s32.totalorder %s9, 0
    %p71 = por %p69, %p70
    %p72 = scmp.ne.s32.totalorder %s64, %s66
    %p73 = scmp.eq.s32.totalorder %s14, 1
    %p74 = por %p72, %p73
    %p75 = scmp.ne.s32.totalorder %s66, %s67
    %p76 = scmp.eq.s32.totalorder %s14, 0
    %p77 = por %p75, %p76
    %p78 = scmp.ne.s32.totalorder %s66, %s67
    %p79 = scmp.eq.s32.totalorder %s15, 1
    %p80 = por %p78, %p79
    %p82 = scmp.ne.s32.totalorder %s67, %s81
    %p83 = scmp.eq.s32.totalorder %s15, 0
    %p84 = por %p82, %p83
    %s85 = ssub.s32 %s9, %s16
    %p86 = scmp.eq.s32.totalorder %s85, 0
    %s88 = sadd.s32 %s87, 1
    %s89 = scalar_select %p86, %s87, %s88
    %p92 = pneg %p86
    %p93 = scmp.eq.s32.totalorder %s9, 1
    %p94 = por %p92, %p93
    %p95 = scmp.ne.s32.totalorder %s87, %s90
    %p96 = scmp.eq.s32.totalorder %s9, 0
    %p97 = por %p95, %p96
    %p98 = scmp.ne.s32.totalorder %s87, %s90
    %p99 = scmp.eq.s32.totalorder %s14, 1
    %p100 = por %p98, %p99
    %p101 = scmp.ne.s32.totalorder %s90, %s91
    %p102 = scmp.eq.s32.totalorder %s14, 0
    %p103 = por %p101, %p102
    %p104 = scmp.ne.s32.totalorder %s90, %s91
    %p105 = scmp.eq.s32.totalorder %s15, 1
    %p106 = por %p104, %p105
    %p108 = scmp.ne.s32.totalorder %s91, %s107
    %p109 = scmp.eq.s32.totalorder %s15, 0
    %p110 = por %p108, %p109
    %p111 = scmp.le.s32.totalorder 1, %s9
    %p112 = scmp.lt.s32.totalorder %s9, 3
    %p113 = pnand %p111, %p112
    %p114 = pneg %p113
    // Predicated region
    $region9: #{upsample_with_conv.1} parent=5 // pred_check
      _
    $region10: #{upsample_with_conv.1} parent=5 // pred_check_branch
      %116 = sbr.rel (%p113) target = $region12
    $region11: #{upsample_with_conv.1} parent=5 // pred_region
      %s117 = ssub.s32 %s9, 1
      // Predicated region
      $region13: #{upsample_with_conv.1} parent=11 // pred_check
        %p118 = pneg %p56
      $region14: #{upsample_with_conv.1} parent=11 // pred_check_branch
        %120 = sbr.rel (%p118) target = $region16
      $region15: #{upsample_with_conv.1} parent=11 // pred_region
        _
      $region16: #{upsample_with_conv.1} parent=11 // pred_fallthru
        _
      // Predicated region
      $region17: #{upsample_with_conv.1} parent=11 // pred_check
        %p121 = pneg %p77
      $region18: #{upsample_with_conv.1} parent=11 // pred_check_branch
        %123 = sbr.rel (%p121) target = $region20
      $region19: #{upsample_with_conv.1} parent=11 // pred_region
        _
      $region20: #{upsample_with_conv.1} parent=11 // pred_fallthru
        _
    $region12: #{upsample_with_conv.1} parent=5 // pred_fallthru
      _
    %p124 = scmp.lt.s32.totalorder %s9, 2
    // Predicated region
    $region21: #{upsample_with_conv.1} parent=5 // pred_check
      %p125 = pneg %p124
    $region22: #{upsample_with_conv.1} parent=5 // pred_check_branch
      %127 = sbr.rel (%p125) target = $region24
    $region23: #{upsample_with_conv.1} parent=5 // pred_region
      // Predicated region
      $region25: #{upsample_with_conv.1} parent=23 // pred_check
        %p128 = pneg %p29
      $region26: #{upsample_with_conv.1} parent=23 // pred_check_branch
        %130 = sbr.rel (%p128) target = $region28
      $region27: #{upsample_with_conv.1} parent=23 // pred_region
        %p131 = scmp.lt.s32.totalorder %s9, 1
        %s132 = scalar_select %p131, %s9, 1
        %s133 = smul.addr %s132, 3
        %s134 = smul.addr %s133, 4
        %s135 = scalar_lea.vmem %s0, %s134
      $region28: #{upsample_with_conv.1} parent=23 // pred_fallthru
        _
    $region24: #{upsample_with_conv.1} parent=5 // pred_fallthru
      _
    %p136 = scmp.le.s32.totalorder 1, %s9
    %p137 = scmp.lt.s32.totalorder %s9, 3
    %p138 = pnand %p136, %p137
    %p139 = pneg %p138
    // Predicated region
    $region29: #{upsample_with_conv.1} parent=5 // pred_check
      _
    $region30: #{upsample_with_conv.1} parent=5 // pred_check_branch
      %141 = sbr.rel (%p138) target = $region32
    $region31: #{upsample_with_conv.1} parent=5 // pred_region
      %s142 = ssub.s32 %s9, 1
      %p143 = scmp.lt.s32.totalorder %s14, 1
      %s144 = scalar_select %p143, %s14, 1
      %s145 = smul.addr %s144, 3
      %s146 = smul.addr %s145, 4
      %s147 = scalar_lea.vmem %s0, %s146
      %p148 = pneg %p35
      %p149 = pneg %p32
      %p150 = pneg %p56
      %p151 = pneg %p53
      %p152 = pneg %p77
      %p153 = pneg %p74
      %p154 = pneg %p103
      %p155 = pneg %p100
      %p156 = scmp.lt.s32.totalorder %s14, 1
      %s157 = scalar_select %p156, %s14, 1
      %s158 = smul.addr %s157, 8
      %s159 = smul.addr %s158, 4
      %s160 = scalar_lea.vmem %s3, %s159
      %p161 = scmp.lt.s32.totalorder %s14, 1
      %s162 = scalar_select %p161, %s14, 1
      %s163 = smul.addr %s162, 3
      %s164 = smul.addr %s163, 4
      %s165 = scalar_lea.vmem %s0, %s164
      %p166 = scmp.lt.s32.totalorder %s14, 1
      %s167 = scalar_select %p166, %s14, 1
      %s168 = smul.addr %s167, 8
      %s169 = smul.addr %s168, 4
      %s170 = scalar_lea.vmem %s3, %s169
      %v171 = vlaneseq
      %v172 = vand.u32 %v171, 127
      %v173 = vadd.s32 %v172, 128
      %vm174 = vcmp.lt.s32.totalorder %v172, 0
      %v175 = vsub.s32 0, %v172
      %v176 = vsel %vm174, %v175, %v172
      %v177 = vshrl.u32 %v176, 4
      %v178 = vand.u32 %v176, 15
      %v179 = vsub.s32 0, %v178
      %v180 = vsel %vm174, %v179, %v178
      %vm181 = vcmp.lt.s32.totalorder %v173, 0
      %v182 = vsub.s32 0, %v173
      %v183 = vsel %vm181, %v182, %v173
      %v184 = vshrl.u32 %v183, 4
      %v185 = vand.u32 %v183, 15
      %v186 = vsub.s32 0, %v185
      %v187 = vsel %vm181, %v186, %v185
      %vm188 = vcmp.ne.s32.totalorder %v180, 0
      %vm189 = vcmp.ne.s32.totalorder %v187, 0
      %vm190 = vcmp.lt.s32.totalorder %v180, 0
      %vm191 = vcmp.lt.s32.totalorder %v187, 0
      %vm192 = vmand %vm190, %vm188
      %vm193 = vmand %vm191, %vm189
      %v194 = vadd.s32 %v180, 16
      %v195 = vadd.s32 %v187, 16
      %v196 = vsel %vm192, %v194, %v180
      %v197 = vsel %vm193, %v195, %v187
      %vm198 = vcmp.gt.s32.totalorder %v196, 0
      %vm199 = vcmp.gt.s32.totalorder %v197, 0
      %vm200 = vcmp.lt.s32.totalorder %v196, 15
      %vm201 = vcmp.lt.s32.totalorder %v197, 15
      %v202 = vld [vmem:[%s165] sm:$0xff]
      %v203 = vsel %vm198, 1, 0
      %v204 = vsel %vm199, 1, 0
      %vm205 = vcmp.eq.s32.totalorder %v203, 1
      %vm206 = vcmp.eq.s32.totalorder %v204, 1
      %208 = vst [vmem:[#allocation1] ss:$2 sm:$0xff] %v202
      %v209 = vld.sshfl [vmem:[#allocation1] sm:$0xff pattern:$0x75316420]
      %v210 = vld.sshfl [vmem:[#allocation1 + $0x8] sm:$0xff pattern:$0x75316420]
      %v213 = vsel %vm205, %v209, 0.0
      %v214 = vsel %vm206, %v210, 0.0
      %v215 = vld [vmem:[%s165] sm:$0xff]
      %v216 = vld [vmem:[%s165 + $0x8] sm:$0xf]
      %v217 = vsel %vm200, 1, 0
      %v218 = vsel %vm201, 1, 0
      %vm219 = vcmp.eq.s32.totalorder %v217, 1
      %vm220 = vcmp.eq.s32.totalorder %v218, 1
      %223 = vst [vmem:[#allocation1] ss:$2 sm:$0xff] %v215
      %s224 = scalar_lea.vmem [#allocation1], 16
      %225 = vst [vmem:[%s224] ss:$2 sm:$0xff] %v216
      %v226 = vld.sshfl [vmem:[#allocation1] sm:$0xff pattern:$0x75316420]
      %v227 = vld.sshfl [vmem:[#allocation1 + $0x8] sm:$0xff pattern:$0x75316420]
      %v228 = vld.sshfl [vmem:[#allocation1 + $0x10] sm:$0xff pattern:$0x75316420]
      %229 = vrot.lane.b32.xlu0 %v226, 126
      %v230 = vpop.permute.xlu0 %229
      %231 = vrot.lane.b32.xlu0 %v227, 126
      %v232 = vpop.permute.xlu0 %231
      %233 = vrot.lane.b32.xlu0 %v228, 126
      %v234 = vpop.permute.xlu0 %233
      %vm235 = vcmask 1031168
      %v236 = vsel %vm235, %v230, %v232
      %v237 = vsel %vm235, %v232, %v234
      %v240 = vsel %vm219, %v236, 0.0
      %v241 = vsel %vm220, %v237, 0.0
      %v242 = vld [vmem:[%s165] sm:$0xff]
      %v243 = vld [vmem:[%s165 + $0x8] sm:$0xf]
      %246 = vst [vmem:[#allocation1] ss:$2 sm:$0xff] %v242
      %s247 = scalar_lea.vmem [#allocation1], 16
      %248 = vst [vmem:[%s247] ss:$2 sm:$0xff] %v243
      %v249 = vld.sshfl [vmem:[#allocation1] sm:$0xff pattern:$0x75316420]
      %v250 = vld.sshfl [vmem:[#allocation1 + $0x8] sm:$0xff pattern:$0x75316420]
      %v251 = vld.sshfl [vmem:[#allocation1 + $0x10] sm:$0xff pattern:$0x75316420]
      %252 = vrot.lane.b32.xlu0 %v249, 112
      %v253 = vpop.permute.xlu0 %252
      %254 = vrot.lane.b32.xlu0 %v250, 112
      %v255 = vpop.permute.xlu0 %254
      %256 = vrot.lane.b32.xlu0 %v251, 112
      %v257 = vpop.permute.xlu0 %256
      %vm258 = vcmask 916480
      %v259 = vsel %vm258, %v253, %v255
      %v260 = vsel %vm258, %v255, %v257
      %v263 = vsel %vm205, %v259, 0.0
      %v264 = vsel %vm206, %v260, 0.0
      %v265 = vld [vmem:[%s165] sm:$0xff]
      %v266 = vld [vmem:[%s165 + $0x8] sm:$0xf]
      %269 = vst [vmem:[#allocation1] ss:$2 sm:$0xff] %v265
      %s270 = scalar_lea.vmem [#allocation1], 16
      %271 = vst [vmem:[%s270] ss:$2 sm:$0xff] %v266
      %v272 = vld.sshfl [vmem:[#allocation1] sm:$0xff pattern:$0x75316420]
      %v273 = vld.sshfl [vmem:[#allocation1 + $0x8] sm:$0xff pattern:$0x75316420]
      %v274 = vld.sshfl [vmem:[#allocation1 + $0x10] sm:$0xff pattern:$0x75316420]
      %275 = vrot.lane.b32.xlu0 %v272, 110
      %v276 = vpop.permute.xlu0 %275
      %277 = vrot.lane.b32.xlu0 %v273, 110
      %v278 = vpop.permute.xlu0 %277
      %279 = vrot.lane.b32.xlu0 %v274, 110
      %v280 = vpop.permute.xlu0 %279
      %vm281 = vcmask 900096
      %v282 = vsel %vm281, %v276, %v278
      %v283 = vsel %vm281, %v278, %v280
      %v286 = vsel %vm219, %v282, 0.0
      %v287 = vsel %vm220, %v283, 0.0
      %v288 = vld [vmem:[%s165] sm:$0xff]
      %v289 = vld [vmem:[%s165 + $0x8] sm:$0xf]
      %292 = vst [vmem:[#allocation1] ss:$2 sm:$0xff] %v288
      %s293 = scalar_lea.vmem [#allocation1], 16
      %294 = vst [vmem:[%s293] ss:$2 sm:$0xff] %v289
      %v295 = vld.sshfl [vmem:[#allocation1] sm:$0xff pattern:$0x75316420]
      %v296 = vld.sshfl [vmem:[#allocation1 + $0x8] sm:$0xff pattern:$0x75316420]
      %v297 = vld.sshfl [vmem:[#allocation1 + $0x10] sm:$0xff pattern:$0x75316420]
      %298 = vrot.lane.b32.xlu0 %v295, 96
      %v299 = vpop.permute.xlu0 %298
      %300 = vrot.lane.b32.xlu0 %v296, 96
      %v301 = vpop.permute.xlu0 %300
      %302 = vrot.lane.b32.xlu0 %v297, 96
      %v303 = vpop.permute.xlu0 %302
      %vm304 = vcmask 785408
      %v305 = vsel %vm304, %v299, %v301
      %v306 = vsel %vm304, %v301, %v303
      %v309 = vsel %vm205, %v305, 0.0
      %v310 = vsel %vm206, %v306, 0.0
      %v311 = vld [vmem:[%s165] sm:$0xff]
      %v312 = vld [vmem:[%s165 + $0x8] sm:$0xf]
      %315 = vst [vmem:[#allocation1] ss:$2 sm:$0xff] %v311
      %s316 = scalar_lea.vmem [#allocation1], 16
      %317 = vst [vmem:[%s316] ss:$2 sm:$0xff] %v312
      %v318 = vld.sshfl [vmem:[#allocation1] sm:$0xff pattern:$0x75316420]
      %v319 = vld.sshfl [vmem:[#allocation1 + $0x8] sm:$0xff pattern:$0x75316420]
      %v320 = vld.sshfl [vmem:[#allocation1 + $0x10] sm:$0xff pattern:$0x75316420]
      %321 = vrot.lane.b32.xlu0 %v318, 94
      %v322 = vpop.permute.xlu0 %321
      %323 = vrot.lane.b32.xlu0 %v319, 94
      %v324 = vpop.permute.xlu0 %323
      %325 = vrot.lane.b32.xlu0 %v320, 94
      %v326 = vpop.permute.xlu0 %325
      %vm327 = vcmask 769024
      %v328 = vsel %vm327, %v322, %v324
      %v329 = vsel %vm327, %v324, %v326
      %v332 = vsel %vm219, %v328, 0.0
      %v333 = vsel %vm220, %v329, 0.0
      %v334 = vld [vmem:[%s2] sm:$0xf]
      %s335 = scalar_lea.vmem [#allocation1], 1
      %336 = vst [vmem:[%s335] ss:$2 sm:$0xff] %v215
      %s337 = scalar_lea.vmem [#allocation1], 17
      %338 = vst [vmem:[%s337] ss:$2 sm:$0xff] %v216
      %v339 = vld.sshfl [vmem:[#allocation1] sm:$0xff pattern:$0x75316420]
      %v340 = vld.sshfl [vmem:[#allocation1 + $0x8] sm:$0xff pattern:$0x75316420]
      %v341 = vld.sshfl [vmem:[#allocation1 + $0x10] sm:$0xff pattern:$0x75316420]
      %342 = vrot.lane.b32.xlu0 %v339, 127
      %v343 = vpop.permute.xlu0 %342
      %344 = vrot.lane.b32.xlu0 %v340, 127
      %v345 = vpop.permute.xlu0 %344
      %346 = vrot.lane.b32.xlu0 %v341, 127
      %v347 = vpop.permute.xlu0 %346
      %vm348 = vcmask 1039360
      %v349 = vsel %vm348, %v343, %v345
      %v350 = vsel %vm348, %v345, %v347
      %s353 = scalar_lea.vmem [#allocation1], 1
      %354 = vst [vmem:[%s353] ss:$2 sm:$0xff] %v265
      %s355 = scalar_lea.vmem [#allocation1], 17
      %356 = vst [vmem:[%s355] ss:$2 sm:$0xff] %v266
      %v357 = vld.sshfl [vmem:[#allocation1] sm:$0xff pattern:$0x75316420]
      %v358 = vld.sshfl [vmem:[#allocation1 + $0x8] sm:$0xff pattern:$0x75316420]
      %v359 = vld.sshfl [vmem:[#allocation1 + $0x10] sm:$0xff pattern:$0x75316420]
      %360 = vrot.lane.b32.xlu0 %v357, 111
      %v361 = vpop.permute.xlu0 %360
      %362 = vrot.lane.b32.xlu0 %v358, 111
      %v363 = vpop.permute.xlu0 %362
      %364 = vrot.lane.b32.xlu0 %v359, 111
      %v365 = vpop.permute.xlu0 %364
      %vm366 = vcmask 908288
      %v367 = vsel %vm366, %v361, %v363
      %v368 = vsel %vm366, %v363, %v365
      %vm371 = vcmask 1043456
      %v372 = vsel %vm371, %v213, %v349
      %v373 = vsel %vm371, %v214, %v350
      %v374 = vsel %vm371, %v263, %v367
      %v375 = vsel %vm371, %v264, %v368
      %v376 = vld [vmem:[%s1] sm:$0xf]
      %378 = vset.pattern.permute.xlu0 0
      %379 = vperm.xlu0 %378, %v334
      %v380 = vpop.permute.xlu0 %379
      %vm382 = vcmask 130048
      %v384 = vsel %vm382, %v376, 0
      %386 = vmatpush.msra.mxu0 0.0
      %387 = vmatpush.msra.mxu0 0.0
      %388 = vmatpush.msra.mxu0 0.0
      %389 = vmatpush.msra.mxu0 0.0
      %390 = vmatpush.msra.mxu0 0.0
      %391 = vmatpush.msra.mxu0 0.0
      %392 = vmatpush.msra.mxu0 0.0
      %393 = vmatpush.msra.mxu0 0.0
      %394 = vmatpush.msra.mxu0 0.0
      %395 = vmatpush.msra.mxu0 0.0
      %396 = vmatpush.msra.mxu0 0.0
      %397 = vmatpush.msra.mxu0 0.0
      %398 = vmatpush.msra.mxu0 0.0
      %399 = vmatpush.msra.mxu0 0.0
      %400 = vmatpush.msra.mxu0 %v374
      %401 = vmatpush.msra.mxu0 %v372
      %402 = vmatmul.f32.gmra.mxu0 %v384
      %v403 = vpop.f32.mrf.mxu0
      %v404 = vadd.f32 %v380, %v403
      %405 = vdwg.mxu0
      %406 = vmatpush.msra.mxu0 0.0
      %407 = vmatpush.msra.mxu0 0.0
      %408 = vmatpush.msra.mxu0 0.0
      %409 = vmatpush.msra.mxu0 0.0
      %410 = vmatpush.msra.mxu0 0.0
      %411 = vmatpush.msra.mxu0 0.0
      %412 = vmatpush.msra.mxu0 0.0
      %413 = vmatpush.msra.mxu0 0.0
      %414 = vmatpush.msra.mxu0 0.0
      %415 = vmatpush.msra.mxu0 0.0
      %416 = vmatpush.msra.mxu0 0.0
      %417 = vmatpush.msra.mxu0 0.0
      %418 = vmatpush.msra.mxu0 0.0
      %419 = vmatpush.msra.mxu0 0.0
      %420 = vmatpush.msra.mxu0 %v375
      %421 = vmatpush.msra.mxu0 %v373
      %422 = vmatmul.f32.gmra.mxu0 %v384
      %v423 = vpop.f32.mrf.mxu0
      %v424 = vadd.f32 %v380, %v423
      %425 = vdwg.mxu0
      %v428 = vrot.slane %v424, 4
      %v429 = vsel %vm371, %v404, %v428
      %431 = vst [vmem:[%s170] sm:$0xff] %v429
      %432 = vst [vmem:[#allocation1] ss:$2 sm:$0xff] %v215
      %s433 = scalar_lea.vmem [#allocation1], 16
      %434 = vst [vmem:[%s433] ss:$2 sm:$0xff] %v216
      %v435 = vld.sshfl [vmem:[#allocation1] sm:$0xff pattern:$0x75316420]
      %v436 = vld.sshfl [vmem:[#allocation1 + $0x8] sm:$0xff pattern:$0x75316420]
      %v437 = vld.sshfl [vmem:[#allocation1 + $0x10] sm:$0xff pattern:$0x75316420]
      %v443 = vrot.slane %v240, 4
      %v444 = vrot.slane %v241, 4
      %445 = vrot.lane.b32.xlu0 %v443, 1
      %v446 = vpop.permute.xlu0 %445
      %447 = vrot.lane.b32.xlu0 %v444, 1
      %v448 = vpop.permute.xlu0 %447
      %vm449 = vcmask 7168
      %v450 = vsel %vm449, %v446, %v448
      %454 = vst [vmem:[#allocation1] ss:$2 sm:$0xff] %v265
      %s455 = scalar_lea.vmem [#allocation1], 16
      %456 = vst [vmem:[%s455] ss:$2 sm:$0xff] %v266
      %v457 = vld.sshfl [vmem:[#allocation1] sm:$0xff pattern:$0x75316420]
      %v458 = vld.sshfl [vmem:[#allocation1 + $0x8] sm:$0xff pattern:$0x75316420]
      %v459 = vld.sshfl [vmem:[#allocation1 + $0x10] sm:$0xff pattern:$0x75316420]
      %460 = vrot.lane.b32.xlu0 %v457, 112
      %v461 = vpop.permute.xlu0 %460
      %462 = vrot.lane.b32.xlu0 %v458, 112
      %v463 = vpop.permute.xlu0 %462
      %464 = vrot.lane.b32.xlu0 %v459, 112
      %v465 = vpop.permute.xlu0 %464
      %v466 = vsel %vm258, %v461, %v463
      %v467 = vsel %vm258, %v463, %v465
      %v473 = vrot.slane %v286, 4
      %v474 = vrot.slane %v287, 4
      %475 = vrot.lane.b32.xlu0 %v473, 1
      %v476 = vpop.permute.xlu0 %475
      %477 = vrot.lane.b32.xlu0 %v474, 1
      %v478 = vpop.permute.xlu0 %477
      %v479 = vsel %vm449, %v476, %v478
      %v483 = vsel %vm371, %v435, %v446
      %v484 = vsel %vm371, %v436, %v450
      %v485 = vsel %vm371, %v437, %v448
      %v486 = vsel %vm371, %v466, %v476
      %v487 = vsel %vm371, %v467, %v479
      %v488 = vsel %vm371, %v465, %v478
      %s489 = scalar_lea.vmem %s1, 4
      %v490 = vld [vmem:[%s489] sm:$0xf]
      %497 = vrot.lane.b32.xlu0 %v483, 127
      %v498 = vpop.permute.xlu0 %497
      %499 = vrot.lane.b32.xlu0 %v484, 127
      %v500 = vpop.permute.xlu0 %499
      %501 = vrot.lane.b32.xlu0 %v485, 127
      %v502 = vpop.permute.xlu0 %501
      %503 = vrot.lane.b32.xlu0 %v486, 127
      %v504 = vpop.permute.xlu0 %503
      %505 = vrot.lane.b32.xlu0 %v487, 127
      %v506 = vpop.permute.xlu0 %505
      %507 = vrot.lane.b32.xlu0 %v488, 127
      %v508 = vpop.permute.xlu0 %507
      %v509 = vsel %vm348, %v498, %v500
      %v510 = vsel %vm348, %v500, %v502
      %v511 = vsel %vm348, %v504, %v506
      %v512 = vsel %vm348, %v506, %v508
      %v518 = vsel %vm382, %v490, 0
      %520 = vmatpush.msra.mxu0 0.0
      %521 = vmatpush.msra.mxu0 0.0
      %522 = vmatpush.msra.mxu0 0.0
      %523 = vmatpush.msra.mxu0 0.0
      %524 = vmatpush.msra.mxu0 0.0
      %525 = vmatpush.msra.mxu0 0.0
      %526 = vmatpush.msra.mxu0 0.0
      %527 = vmatpush.msra.mxu0 0.0
      %528 = vmatpush.msra.mxu0 0.0
      %529 = vmatpush.msra.mxu0 0.0
      %530 = vmatpush.msra.mxu0 0.0
      %531 = vmatpush.msra.mxu0 0.0
      %532 = vmatpush.msra.mxu0 0.0
      %533 = vmatpush.msra.mxu0 0.0
      %534 = vmatpush.msra.mxu0 %v511
      %535 = vmatpush.msra.mxu0 %v509
      %536 = vmatmul.f32.gmra.mxu0 %v518
      %v537 = vpop.f32.mrf.mxu0
      %v538 = vadd.f32 %v380, %v537
      %539 = vdwg.mxu0
      %540 = vmatpush.msra.mxu0 0.0
      %541 = vmatpush.msra.mxu0 0.0
      %542 = vmatpush.msra.mxu0 0.0
      %543 = vmatpush.msra.mxu0 0.0
      %544 = vmatpush.msra.mxu0 0.0
      %545 = vmatpush.msra.mxu0 0.0
      %546 = vmatpush.msra.mxu0 0.0
      %547 = vmatpush.msra.mxu0 0.0
      %548 = vmatpush.msra.mxu0 0.0
      %549 = vmatpush.msra.mxu0 0.0
      %550 = vmatpush.msra.mxu0 0.0
      %551 = vmatpush.msra.mxu0 0.0
      %552 = vmatpush.msra.mxu0 0.0
      %553 = vmatpush.msra.mxu0 0.0
      %554 = vmatpush.msra.mxu0 %v512
      %555 = vmatpush.msra.mxu0 %v510
      %556 = vmatmul.f32.gmra.mxu0 %v518
      %v557 = vpop.f32.mrf.mxu0
      %v558 = vadd.f32 %v380, %v557
      %559 = vdwg.mxu0
      %v562 = vrot.slane %v558, 4
      %v563 = vsel %vm371, %v538, %v562
      %s565 = scalar_lea.vmem %s170, 8
      %566 = vst [vmem:[%s565] sm:$0xff] %v563
      %s567 = scalar_lea.vmem [#allocation1], 1
      %568 = vst [vmem:[%s567] ss:$2 sm:$0xff] %v265
      %s569 = scalar_lea.vmem [#allocation1], 17
      %570 = vst [vmem:[%s569] ss:$2 sm:$0xff] %v266
      %v571 = vld.sshfl [vmem:[#allocation1] sm:$0xff pattern:$0x75316420]
      %v572 = vld.sshfl [vmem:[#allocation1 + $0x8] sm:$0xff pattern:$0x75316420]
      %v573 = vld.sshfl [vmem:[#allocation1 + $0x10] sm:$0xff pattern:$0x75316420]
      %574 = vrot.lane.b32.xlu0 %v571, 111
      %v575 = vpop.permute.xlu0 %574
      %576 = vrot.lane.b32.xlu0 %v572, 111
      %v577 = vpop.permute.xlu0 %576
      %578 = vrot.lane.b32.xlu0 %v573, 111
      %v579 = vpop.permute.xlu0 %578
      %v580 = vsel %vm366, %v575, %v577
      %v581 = vsel %vm366, %v577, %v579
      %s584 = scalar_lea.vmem [#allocation1], 1
      %585 = vst [vmem:[%s584] ss:$2 sm:$0xff] %v311
      %s586 = scalar_lea.vmem [#allocation1], 17
      %587 = vst [vmem:[%s586] ss:$2 sm:$0xff] %v312
      %v588 = vld.sshfl [vmem:[#allocation1] sm:$0xff pattern:$0x75316420]
      %v589 = vld.sshfl [vmem:[#allocation1 + $0x8] sm:$0xff pattern:$0x75316420]
      %v590 = vld.sshfl [vmem:[#allocation1 + $0x10] sm:$0xff pattern:$0x75316420]
      %591 = vrot.lane.b32.xlu0 %v588, 95
      %v592 = vpop.permute.xlu0 %591
      %593 = vrot.lane.b32.xlu0 %v589, 95
      %v594 = vpop.permute.xlu0 %593
      %595 = vrot.lane.b32.xlu0 %v590, 95
      %v596 = vpop.permute.xlu0 %595
      %vm597 = vcmask 777216
      %v598 = vsel %vm597, %v592, %v594
      %v599 = vsel %vm597, %v594, %v596
      %v602 = vsel %vm371, %v263, %v580
      %v603 = vsel %vm371, %v264, %v581
      %v604 = vsel %vm371, %v309, %v598
      %v605 = vsel %vm371, %v310, %v599
      %s606 = scalar_lea.vmem %s1, 8
      %v607 = vld [vmem:[%s606] sm:$0xf]
      %v609 = vsel %vm382, %v607, 0
      %611 = vmatpush.msra.mxu0 0.0
      %612 = vmatpush.msra.mxu0 0.0
      %613 = vmatpush.msra.mxu0 0.0
      %614 = vmatpush.msra.mxu0 0.0
      %615 = vmatpush.msra.mxu0 0.0
      %616 = vmatpush.msra.mxu0 0.0
      %617 = vmatpush.msra.mxu0 0.0
      %618 = vmatpush.msra.mxu0 0.0
      %619 = vmatpush.msra.mxu0 0.0
      %620 = vmatpush.msra.mxu0 0.0
      %621 = vmatpush.msra.mxu0 0.0
      %622 = vmatpush.msra.mxu0 0.0
      %623 = vmatpush.msra.mxu0 0.0
      %624 = vmatpush.msra.mxu0 0.0
      %625 = vmatpush.msra.mxu0 %v604
      %626 = vmatpush.msra.mxu0 %v602
      %627 = vmatmul.f32.gmra.mxu0 %v609
      %v628 = vpop.f32.mrf.mxu0
      %v629 = vadd.f32 %v380, %v628
      %630 = vdwg.mxu0
      %631 = vmatpush.msra.mxu0 0.0
      %632 = vmatpush.msra.mxu0 0.0
      %633 = vmatpush.msra.mxu0 0.0
      %634 = vmatpush.msra.mxu0 0.0
      %635 = vmatpush.msra.mxu0 0.0
      %636 = vmatpush.msra.mxu0 0.0
      %637 = vmatpush.msra.mxu0 0.0
      %638 = vmatpush.msra.mxu0 0.0
      %639 = vmatpush.msra.mxu0 0.0
      %640 = vmatpush.msra.mxu0 0.0
      %641 = vmatpush.msra.mxu0 0.0
      %642 = vmatpush.msra.mxu0 0.0
      %643 = vmatpush.msra.mxu0 0.0
      %644 = vmatpush.msra.mxu0 0.0
      %645 = vmatpush.msra.mxu0 %v605
      %646 = vmatpush.msra.mxu0 %v603
      %647 = vmatmul.f32.gmra.mxu0 %v609
      %v648 = vpop.f32.mrf.mxu0
      %v649 = vadd.f32 %v380, %v648
      %650 = vdwg.mxu0
      %v653 = vrot.slane %v649, 4
      %v654 = vsel %vm371, %v629, %v653
      %s656 = scalar_lea.vmem %s170, 16
      %657 = vst [vmem:[%s656] sm:$0xff] %v654
      %658 = vst [vmem:[#allocation1] ss:$2 sm:$0xff] %v265
      %s659 = scalar_lea.vmem [#allocation1], 16
      %660 = vst [vmem:[%s659] ss:$2 sm:$0xff] %v266
      %v661 = vld.sshfl [vmem:[#allocation1] sm:$0xff pattern:$0x75316420]
      %v662 = vld.sshfl [vmem:[#allocation1 + $0x8] sm:$0xff pattern:$0x75316420]
      %v663 = vld.sshfl [vmem:[#allocation1 + $0x10] sm:$0xff pattern:$0x75316420]
      %667 = vrot.lane.b32.xlu0 %v473, 17
      %v668 = vpop.permute.xlu0 %667
      %669 = vrot.lane.b32.xlu0 %v474, 17
      %v670 = vpop.permute.xlu0 %669
      %vm671 = vcmask 138240
      %v672 = vsel %vm671, %v668, %v670
      %676 = vst [vmem:[#allocation1] ss:$2 sm:$0xff] %v311
      %s677 = scalar_lea.vmem [#allocation1], 16
      %678 = vst [vmem:[%s677] ss:$2 sm:$0xff] %v312
      %v679 = vld.sshfl [vmem:[#allocation1] sm:$0xff pattern:$0x75316420]
      %v680 = vld.sshfl [vmem:[#allocation1 + $0x8] sm:$0xff pattern:$0x75316420]
      %v681 = vld.sshfl [vmem:[#allocation1 + $0x10] sm:$0xff pattern:$0x75316420]
      %682 = vrot.lane.b32.xlu0 %v679, 112
      %v683 = vpop.permute.xlu0 %682
      %684 = vrot.lane.b32.xlu0 %v680, 112
      %v685 = vpop.permute.xlu0 %684
      %686 = vrot.lane.b32.xlu0 %v681, 112
      %v687 = vpop.permute.xlu0 %686
      %v688 = vsel %vm258, %v683, %v685
      %v689 = vsel %vm258, %v685, %v687
      %v695 = vrot.slane %v332, 4
      %v696 = vrot.slane %v333, 4
      %697 = vrot.lane.b32.xlu0 %v695, 17
      %v698 = vpop.permute.xlu0 %697
      %699 = vrot.lane.b32.xlu0 %v696, 17
      %v700 = vpop.permute.xlu0 %699
      %v701 = vsel %vm671, %v698, %v700
      %v705 = vsel %vm371, %v661, %v668
      %v706 = vsel %vm371, %v662, %v672
      %v707 = vsel %vm371, %v663, %v670
      %v708 = vsel %vm371, %v688, %v698
      %v709 = vsel %vm371, %v689, %v701
      %v710 = vsel %vm371, %v687, %v700
      %s711 = scalar_lea.vmem %s1, 12
      %v712 = vld [vmem:[%s711] sm:$0xf]
      %719 = vrot.lane.b32.xlu0 %v705, 111
      %v720 = vpop.permute.xlu0 %719
      %721 = vrot.lane.b32.xlu0 %v706, 111
      %v722 = vpop.permute.xlu0 %721
      %723 = vrot.lane.b32.xlu0 %v707, 111
      %v724 = vpop.permute.xlu0 %723
      %725 = vrot.lane.b32.xlu0 %v708, 111
      %v726 = vpop.permute.xlu0 %725
      %727 = vrot.lane.b32.xlu0 %v709, 111
      %v728 = vpop.permute.xlu0 %727
      %729 = vrot.lane.b32.xlu0 %v710, 111
      %v730 = vpop.permute.xlu0 %729
      %v731 = vsel %vm366, %v720, %v722
      %v732 = vsel %vm366, %v722, %v724
      %v733 = vsel %vm366, %v726, %v728
      %v734 = vsel %vm366, %v728, %v730
      %v740 = vsel %vm382, %v712, 0
      %742 = vmatpush.msra.mxu0 0.0
      %743 = vmatpush.msra.mxu0 0.0
      %744 = vmatpush.msra.mxu0 0.0
      %745 = vmatpush.msra.mxu0 0.0
      %746 = vmatpush.msra.mxu0 0.0
      %747 = vmatpush.msra.mxu0 0.0
      %748 = vmatpush.msra.mxu0 0.0
      %749 = vmatpush.msra.mxu0 0.0
      %750 = vmatpush.msra.mxu0 0.0
      %751 = vmatpush.msra.mxu0 0.0
      %752 = vmatpush.msra.mxu0 0.0
      %753 = vmatpush.msra.mxu0 0.0
      %754 = vmatpush.msra.mxu0 0.0
      %755 = vmatpush.msra.mxu0 0.0
      %756 = vmatpush.msra.mxu0 %v733
      %757 = vmatpush.msra.mxu0 %v731
      %758 = vmatmul.f32.gmra.mxu0 %v740
      %v759 = vpop.f32.mrf.mxu0
      %v760 = vadd.f32 %v380, %v759
      %761 = vdwg.mxu0
      %762 = vmatpush.msra.mxu0 0.0
      %763 = vmatpush.msra.mxu0 0.0
      %764 = vmatpush.msra.mxu0 0.0
      %765 = vmatpush.msra.mxu0 0.0
      %766 = vmatpush.msra.mxu0 0.0
      %767 = vmatpush.msra.mxu0 0.0
      %768 = vmatpush.msra.mxu0 0.0
      %769 = vmatpush.msra.mxu0 0.0
      %770 = vmatpush.msra.mxu0 0.0
      %771 = vmatpush.msra.mxu0 0.0
      %772 = vmatpush.msra.mxu0 0.0
      %773 = vmatpush.msra.mxu0 0.0
      %774 = vmatpush.msra.mxu0 0.0
      %775 = vmatpush.msra.mxu0 0.0
      %776 = vmatpush.msra.mxu0 %v734
      %777 = vmatpush.msra.mxu0 %v732
      %778 = vmatmul.f32.gmra.mxu0 %v740
      %v779 = vpop.f32.mrf.mxu0
      %v780 = vadd.f32 %v380, %v779
      %781 = vdwg.mxu0
      %v784 = vrot.slane %v780, 4
      %v785 = vsel %vm371, %v760, %v784
      %s787 = scalar_lea.vmem %s170, 24
      %788 = vst [vmem:[%s787] sm:$0xff] %v785
      %p789 = scmp.lt.s32.totalorder %s14, 1
      %s790 = scalar_select %p789, %s14, 1
      %s791 = smul.addr %s790, 8
      %s792 = smul.addr %s791, 4
      %s793 = scalar_lea.vmem %s3, %s792
      // Predicated region
      $region33: #{upsample_with_conv.1} parent=31 // pred_check
        %p794 = pneg %p100
      $region34: #{upsample_with_conv.1} parent=31 // pred_check_branch
        %796 = sbr.rel (%p794) target = $region36
      $region35: #{upsample_with_conv.1} parent=31 // pred_region
        _
      $region36: #{upsample_with_conv.1} parent=31 // pred_fallthru
        _
    $region32: #{upsample_with_conv.1} parent=5 // pred_fallthru
      _
    %p797 = scmp.le.s32.totalorder 2, %s9
    // Predicated region
    $region37: #{upsample_with_conv.1} parent=5 // pred_check
      %p798 = pneg %p797
    $region38: #{upsample_with_conv.1} parent=5 // pred_check_branch
      %800 = sbr.rel (%p798) target = $region40
    $region39: #{upsample_with_conv.1} parent=5 // pred_region
      %s801 = ssub.s32 %s9, 2
      // Predicated region
      $region41: #{upsample_with_conv.1} parent=39 // pred_check
        %p802 = pneg %p106
      $region42: #{upsample_with_conv.1} parent=39 // pred_check_branch
        %804 = sbr.rel (%p802) target = $region44
      $region43: #{upsample_with_conv.1} parent=39 // pred_region
        %p805 = scmp.lt.s32.totalorder %s15, 1
        %s806 = scalar_select %p805, %s15, 1
        %s807 = smul.addr %s806, 8
        %s808 = smul.addr %s807, 4
        %s809 = scalar_lea.vmem %s3, %s808
      $region44: #{upsample_with_conv.1} parent=39 // pred_fallthru
        _
    $region40: #{upsample_with_conv.1} parent=5 // pred_fallthru
      _
  $region6: #{upsample_with_conv.1} parent=0 // loop_footer
    %s13 = sadd.s32 1, %s9
  $region7: #{upsample_with_conv.1} parent=0 // loop_footer_branch
    %8 = sbr.rel target = $region3
  $region8: #{upsample_with_conv.1} parent=0 // loop_exit
    _

</llo_original>
